<compile_context>
chip_gen: v7x
topology: tpu7x:2x2x1
jax: 0.10.0
libtpu: 0.0.40
codegen_flags: <defaults>
</compile_context>

<pallas_src>
import functools

import jax
import jax.numpy as jnp
from jax import lax
from jax.experimental import pallas as pl
from jax.experimental.pallas import tpu as pltpu


def _round_up(x, m):
    return ((x + m - 1) // m) * m


def concat_conv2d(t, x, weight, bias, *, ksize=3, stride=1, padding=0,
                  dilation=1, block_rows=128):
    """ConcatConv2d forward.

    x: (N, C, H, W) NCHW, t: scalar,
    weight: (dim_out, dim_in + 1, ksize, ksize) OIHW (channel 0 = time),
    bias: (dim_out,).  Returns (N, dim_out, OH, OW) NCHW.
    """
    N, C, H, W = x.shape
    dim_out = weight.shape[0]
    k, d, s, p = ksize, dilation, stride, padding

    # ---- exact time-channel fold (valid for every padding) -----------------
    # Interior outputs see the constant t through every tap -> fold
    # t * sum(w_time) into the bias.  For padding > 0 the thin border where
    # some time taps land on zero padding is fixed after the kernel with a
    # precomputed additive correction (see below).
    w_data = weight[:, 1:]                                  # (dim_out, C, k, k)
    w_time = weight[:, 0]                                   # (dim_out, k, k)
    b_eff = (bias + t * jnp.sum(w_time, axis=(1, 2))).astype(jnp.float32)

    # ---- layout plumbing (NCHW -> row-flattened NHWC, one cheap pass) ------
    x_nhwc = jnp.transpose(x, (0, 2, 3, 1))                 # (N, H, W, C)
    if p > 0:
        x_nhwc = jnp.pad(x_nhwc, ((0, 0), (p, p), (p, p), (0, 0)))
    Hp, Wp = H + 2 * p, W + 2 * p
    HW = Hp * Wp
    OH1 = Hp - d * (k - 1)                                  # stride-1 valid extents
    OW1 = Wp - d * (k - 1)
    x_rows = x_nhwc.reshape(N, HW, C)

    Cp = _round_up(C, 8)                                    # channel sublane pad
    BR = min(_round_up(block_rows, 8), _round_up(HW, 8))    # rows per grid step
    HWt = _round_up(HW, BR)                                 # rows padded to tiles
    RT = HWt // BR
    max_shift = (k - 1) * d * (Wp + 1)
    Rp = _round_up(HWt + max_shift, 8)                      # rows incl. shift tail
    x_rows = jnp.pad(x_rows, ((0, 0), (0, Rp - HW), (0, Cp - C)))

    NP = _round_up(dim_out, 128)                            # lane-dense output
    KREAL = k * k * Cp                                      # fused contraction dim
    Kp = _round_up(KREAL, 128)
    KTAIL = Kp - KREAL

    # Fused (kh, kw, c)-major weight matrix (t-independent: in an ODE loop this
    # block can be hoisted and reused across function evaluations).
    w_mat = jnp.transpose(w_data, (2, 3, 1, 0))             # (k, k, C, dim_out)
    w_mat = jnp.pad(w_mat, ((0, 0), (0, 0), (0, Cp - C), (0, NP - dim_out)))
    w_mat = w_mat.reshape(KREAL, NP)
    w_mat = jnp.pad(w_mat, ((0, KTAIL), (0, 0))).astype(x.dtype)
    b_row = jnp.pad(b_eff, (0, NP - dim_out)).reshape(1, NP)

    def kernel(x_ref, w_ref, b_ref, o_ref, patch_ref):
        # x_ref:    (1, Rp, Cp)   whole padded image rows (fetched once per n)
        # w_ref:    (Kp, NP)      fused weight matrix
        # b_ref:    (1, NP)       effective bias (f32)
        # o_ref:    (1, BR, NP)   one row tile of the output
        # patch_ref:(BR, Kp)      in-VMEM im2col patch scratch
        r0 = pl.multiple_of(pl.program_id(1) * BR, 8)       # first row of tile

        # Zero the K tail lanes (weights there are zero, scratch may be stale).
        if KTAIL > 0:
            patch_ref[:, pl.ds(KREAL, KTAIL)] = jnp.zeros((BR, KTAIL),
                                                          patch_ref.dtype)
        # In-kernel im2col: k*k row-shifted windows copied into adjacent
        # lane slots -> a single lane-dense LHS for the MXU.
        j = 0
        for kh in range(k):
            for kw in range(k):
                shift = kh * d * Wp + kw * d                # static offset
                patch_ref[:, pl.ds(j * Cp, Cp)] = x_ref[0, pl.ds(r0 + shift, BR), :]
                j += 1

        # One fused MXU dot (K = k*k*Cp), bias add in f32, single cast + store.
        acc = jnp.dot(patch_ref[...], w_ref[...],
                      preferred_element_type=jnp.float32)
        o_ref[0] = (acc + b_ref[...]).astype(o_ref.dtype)

    out = pl.pallas_call(
        kernel,
        out_shape=jax.ShapeDtypeStruct((N, HWt, NP), x.dtype),
        grid_spec=pltpu.PrefetchScalarGridSpec(
            num_scalar_prefetch=0,
            grid=(N, RT),                                   # batch x row tiles
            in_specs=[
                pl.BlockSpec((1, Rp, Cp), lambda n, r: (n, 0, 0)),
                pl.BlockSpec((Kp, NP), lambda n, r: (0, 0)),
                pl.BlockSpec((1, NP), lambda n, r: (0, 0)),
            ],
            out_specs=pl.BlockSpec((1, BR, NP), lambda n, r: (n, r, 0)),
            scratch_shapes=[pltpu.VMEM((BR, Kp), x.dtype)],
        ),
        compiler_params=pltpu.CompilerParams(
            dimension_semantics=("parallel", "parallel")),
    )(x_rows, w_mat, b_row)

    # Rows past the valid (OH1, OW1) window are wrap-around garbage: slice them
    # (and lane/row padding) off, apply stride, stay NHWC for the border fix.
    out = out[:, :HW, :].reshape(N, Hp, Wp, NP)[:, 0:OH1:s, 0:OW1:s, :dim_out]

    if p > 0:
        # Border correction for the folded time channel: subtract t * (sum of
        # time taps that fall outside the original image).  Exact; nonzero only
        # on a p-wide output border.  Tiny (OH, OW, dim_out) tensor.
        OH, OW = out.shape[1], out.shape[2]
        oh = jnp.arange(OH)[:, None]
        ow = jnp.arange(OW)[:, None]
        kr = jnp.arange(k)[None, :]
        ih = oh * s + kr * d - p                            # (OH, k)
        iw = ow * s + kr * d - p                            # (OW, k)
        in_h = (ih >= 0) & (ih < H)
        in_w = (iw >= 0) & (iw < W)
        outside = 1.0 - (in_h[:, None, :, None]
                         & in_w[None, :, None, :]).astype(jnp.float32)
        corr = (-t) * jnp.einsum('hwij,cij->hwc', outside,
                                 w_time.astype(jnp.float32))
        out = out + corr.astype(out.dtype)

    return jnp.transpose(out, (0, 3, 1, 2))                 # back to NCHW


if __name__ == "__main__":
    key = jax.random.PRNGKey(0)
    k1, k2, k3 = jax.random.split(key, 3)

    # small shapes consistent with the module's forward
    N, dim_in, H, W = 2, 4, 16, 16
    dim_out, ksize = 8, 3

    x = jax.random.normal(k1, (N, dim_in, H, W), jnp.float32)
    t = jnp.float32(0.5)

    # deterministic params, shapes as in nn.Conv2d(dim_in+1, dim_out, 3, bias=True)
    fan_in = (dim_in + 1) * ksize * ksize
    bound = 1.0 / (fan_in ** 0.5)
    weight = jax.random.uniform(k2, (dim_out, dim_in + 1, ksize, ksize),
                                jnp.float32, -bound, bound)
    bias = jax.random.uniform(k3, (dim_out,), jnp.float32, -bound, bound)

    def ref_conv(t, x, weight, bias, padding):
        tt = jnp.full((x.shape[0], 1, x.shape[2], x.shape[3]), t, x.dtype)
        ttx = jnp.concatenate([tt, x], axis=1)
        return lax.conv_general_dilated(
            ttx, weight, window_strides=(1, 1),
            padding=((padding, padding), (padding, padding)),
            dimension_numbers=("NCHW", "OIHW", "NCHW")) + bias.reshape(1, -1, 1, 1)

    for pad in (0, 1):      # padding=0 (module default) and padding=1 (ODEfunc use)
        fwd = jax.jit(functools.partial(concat_conv2d, ksize=ksize, stride=1,
                                        padding=pad))
        out = jax.block_until_ready(fwd(t, x, weight, bias))
        ref = ref_conv(t, x, weight, bias, pad)
        assert out.shape == ref.shape, (pad, out.shape, ref.shape)
        assert jnp.allclose(out, ref, atol=1e-4, rtol=1e-4), pad

    print("KERNEL_OK")
</pallas_src>

<mosaic_0001>
module attributes {stable_mosaic.version = 11 : i64} {
  func.func @kernel(%arg0: i32, %arg1: i32, %arg2: memref<1x296x8xf32, #tpu.memory_space<vmem>>, %arg3: memref<128x128xf32, #tpu.memory_space<vmem>>, %arg4: memref<1x128xf32, #tpu.memory_space<vmem>>, %arg5: memref<1x128x128xf32, #tpu.memory_space<vmem>>, %arg6: memref<128x128xf32, #tpu.memory_space<vmem>>) attributes {dimension_semantics = [#tpu.dimension_semantics<parallel>, #tpu.dimension_semantics<parallel>], iteration_bounds = array<i64: 2, 2>, scalar_prefetch = 0 : i64, scratch_operands = 1 : i64, tpu.core_type = #tpu.core_type<tc>, window_params = [{transform_indices = @transform_0, window_bounds = array<i64: 1, 296, 8>}, {pipeline_mode = #tpu.pipeline_mode<synchronous>, transform_indices = @transform_1, window_bounds = array<i64: 128, 128>}, {pipeline_mode = #tpu.pipeline_mode<synchronous>, transform_indices = @transform_2, window_bounds = array<i64: 1, 128>}, {transform_indices = @transform_3, window_bounds = array<i64: 1, 128, 128>}]} {
    %c128_i32 = arith.constant 128 : i32
    %0 = arith.muli %arg1, %c128_i32 : i32
    %1 = tpu.assume_multiple %0, 8 : i32
    %cst = arith.constant 0.000000e+00 : f32
    %2 = vector.broadcast %cst : f32 to vector<128x56xf32>
    %c0 = arith.constant 0 : index
    %c72 = arith.constant 72 : index
    %3 = vector.load %arg6[%c0, %c72] : memref<128x128xf32, #tpu.memory_space<vmem>>, vector<128x56xf32>
    tpu.vector_store %arg6[%c0, %c72], %2 {strides = array<i32>} : memref<128x128xf32, #tpu.memory_space<vmem>>, vector<128x56xf32>,
    %c0_i32 = arith.constant 0 : i32
    %4 = arith.addi %1, %c0_i32 : i32
    %c0_0 = arith.constant 0 : index
    %5 = arith.index_cast %4 : i32 to index
    %c0_1 = arith.constant 0 : index
    %6 = vector.load %arg2[%c0_0, %5, %c0_1] : memref<1x296x8xf32, #tpu.memory_space<vmem>>, vector<1x128x8xf32>
    %7 = vector.shape_cast %6 : vector<1x128x8xf32> to vector<128x8xf32>
    %c0_2 = arith.constant 0 : index
    %c0_3 = arith.constant 0 : index
    %8 = vector.load %arg6[%c0_2, %c0_3] : memref<128x128xf32, #tpu.memory_space<vmem>>, vector<128x8xf32>
    tpu.vector_store %arg6[%c0_2, %c0_3], %7 {strides = array<i32>} : memref<128x128xf32, #tpu.memory_space<vmem>>, vector<128x8xf32>,
    %c1_i32 = arith.constant 1 : i32
    %9 = arith.addi %1, %c1_i32 : i32
    %c0_4 = arith.constant 0 : index
    %10 = arith.index_cast %9 : i32 to index
    %c0_5 = arith.constant 0 : index
    %11 = vector.load %arg2[%c0_4, %10, %c0_5] : memref<1x296x8xf32, #tpu.memory_space<vmem>>, vector<1x128x8xf32>
    %12 = vector.shape_cast %11 : vector<1x128x8xf32> to vector<128x8xf32>
    %c0_6 = arith.constant 0 : index
    %c8 = arith.constant 8 : index
    %13 = vector.load %arg6[%c0_6, %c8] : memref<128x128xf32, #tpu.memory_space<vmem>>, vector<128x8xf32>
    tpu.vector_store %arg6[%c0_6, %c8], %12 {strides = array<i32>} : memref<128x128xf32, #tpu.memory_space<vmem>>, vector<128x8xf32>,
    %c2_i32 = arith.constant 2 : i32
    %14 = arith.addi %1, %c2_i32 : i32
    %c0_7 = arith.constant 0 : index
    %15 = arith.index_cast %14 : i32 to index
    %c0_8 = arith.constant 0 : index
    %16 = vector.load %arg2[%c0_7, %15, %c0_8] : memref<1x296x8xf32, #tpu.memory_space<vmem>>, vector<1x128x8xf32>
    %17 = vector.shape_cast %16 : vector<1x128x8xf32> to vector<128x8xf32>
    %c0_9 = arith.constant 0 : index
    %c16 = arith.constant 16 : index
    %18 = vector.load %arg6[%c0_9, %c16] : memref<128x128xf32, #tpu.memory_space<vmem>>, vector<128x8xf32>
    tpu.vector_store %arg6[%c0_9, %c16], %17 {strides = array<i32>} : memref<128x128xf32, #tpu.memory_space<vmem>>, vector<128x8xf32>,
    %c16_i32 = arith.constant 16 : i32
    %19 = arith.addi %1, %c16_i32 : i32
    %c0_10 = arith.constant 0 : index
    %20 = arith.index_cast %19 : i32 to index
    %c0_11 = arith.constant 0 : index
    %21 = vector.load %arg2[%c0_10, %20, %c0_11] : memref<1x296x8xf32, #tpu.memory_space<vmem>>, vector<1x128x8xf32>
    %22 = vector.shape_cast %21 : vector<1x128x8xf32> to vector<128x8xf32>
    %c0_12 = arith.constant 0 : index
    %c24 = arith.constant 24 : index
    %23 = vector.load %arg6[%c0_12, %c24] : memref<128x128xf32, #tpu.memory_space<vmem>>, vector<128x8xf32>
    tpu.vector_store %arg6[%c0_12, %c24], %22 {strides = array<i32>} : memref<128x128xf32, #tpu.memory_space<vmem>>, vector<128x8xf32>,
    %c17_i32 = arith.constant 17 : i32
    %24 = arith.addi %1, %c17_i32 : i32
    %c0_13 = arith.constant 0 : index
    %25 = arith.index_cast %24 : i32 to index
    %c0_14 = arith.constant 0 : index
    %26 = vector.load %arg2[%c0_13, %25, %c0_14] : memref<1x296x8xf32, #tpu.memory_space<vmem>>, vector<1x128x8xf32>
    %27 = vector.shape_cast %26 : vector<1x128x8xf32> to vector<128x8xf32>
    %c0_15 = arith.constant 0 : index
    %c32 = arith.constant 32 : index
    %28 = vector.load %arg6[%c0_15, %c32] : memref<128x128xf32, #tpu.memory_space<vmem>>, vector<128x8xf32>
    tpu.vector_store %arg6[%c0_15, %c32], %27 {strides = array<i32>} : memref<128x128xf32, #tpu.memory_space<vmem>>, vector<128x8xf32>,
    %c18_i32 = arith.constant 18 : i32
    %29 = arith.addi %1, %c18_i32 : i32
    %c0_16 = arith.constant 0 : index
    %30 = arith.index_cast %29 : i32 to index
    %c0_17 = arith.constant 0 : index
    %31 = vector.load %arg2[%c0_16, %30, %c0_17] : memref<1x296x8xf32, #tpu.memory_space<vmem>>, vector<1x128x8xf32>
    %32 = vector.shape_cast %31 : vector<1x128x8xf32> to vector<128x8xf32>
    %c0_18 = arith.constant 0 : index
    %c40 = arith.constant 40 : index
    %33 = vector.load %arg6[%c0_18, %c40] : memref<128x128xf32, #tpu.memory_space<vmem>>, vector<128x8xf32>
    tpu.vector_store %arg6[%c0_18, %c40], %32 {strides = array<i32>} : memref<128x128xf32, #tpu.memory_space<vmem>>, vector<128x8xf32>,
    %c32_i32 = arith.constant 32 : i32
    %34 = arith.addi %1, %c32_i32 : i32
    %c0_19 = arith.constant 0 : index
    %35 = arith.index_cast %34 : i32 to index
    %c0_20 = arith.constant 0 : index
    %36 = vector.load %arg2[%c0_19, %35, %c0_20] : memref<1x296x8xf32, #tpu.memory_space<vmem>>, vector<1x128x8xf32>
    %37 = vector.shape_cast %36 : vector<1x128x8xf32> to vector<128x8xf32>
    %c0_21 = arith.constant 0 : index
    %c48 = arith.constant 48 : index
    %38 = vector.load %arg6[%c0_21, %c48] : memref<128x128xf32, #tpu.memory_space<vmem>>, vector<128x8xf32>
    tpu.vector_store %arg6[%c0_21, %c48], %37 {strides = array<i32>} : memref<128x128xf32, #tpu.memory_space<vmem>>, vector<128x8xf32>,
    %c33_i32 = arith.constant 33 : i32
    %39 = arith.addi %1, %c33_i32 : i32
    %c0_22 = arith.constant 0 : index
    %40 = arith.index_cast %39 : i32 to index
    %c0_23 = arith.constant 0 : index
    %41 = vector.load %arg2[%c0_22, %40, %c0_23] : memref<1x296x8xf32, #tpu.memory_space<vmem>>, vector<1x128x8xf32>
    %42 = vector.shape_cast %41 : vector<1x128x8xf32> to vector<128x8xf32>
    %c0_24 = arith.constant 0 : index
    %c56 = arith.constant 56 : index
    %43 = vector.load %arg6[%c0_24, %c56] : memref<128x128xf32, #tpu.memory_space<vmem>>, vector<128x8xf32>
    tpu.vector_store %arg6[%c0_24, %c56], %42 {strides = array<i32>} : memref<128x128xf32, #tpu.memory_space<vmem>>, vector<128x8xf32>,
    %c34_i32 = arith.constant 34 : i32
    %44 = arith.addi %1, %c34_i32 : i32
    %c0_25 = arith.constant 0 : index
    %45 = arith.index_cast %44 : i32 to index
    %c0_26 = arith.constant 0 : index
    %46 = vector.load %arg2[%c0_25, %45, %c0_26] : memref<1x296x8xf32, #tpu.memory_space<vmem>>, vector<1x128x8xf32>
    %47 = vector.shape_cast %46 : vector<1x128x8xf32> to vector<128x8xf32>
    %c0_27 = arith.constant 0 : index
    %c64 = arith.constant 64 : index
    %48 = vector.load %arg6[%c0_27, %c64] : memref<128x128xf32, #tpu.memory_space<vmem>>, vector<128x8xf32>
    tpu.vector_store %arg6[%c0_27, %c64], %47 {strides = array<i32>} : memref<128x128xf32, #tpu.memory_space<vmem>>, vector<128x8xf32>,
    %c0_28 = arith.constant 0 : index
    %c0_29 = arith.constant 0 : index
    %49 = vector.load %arg6[%c0_28, %c0_29] : memref<128x128xf32, #tpu.memory_space<vmem>>, vector<128x128xf32>
    %c0_30 = arith.constant 0 : index
    %c0_31 = arith.constant 0 : index
    %50 = vector.load %arg3[%c0_30, %c0_31] : memref<128x128xf32, #tpu.memory_space<vmem>>, vector<128x128xf32>
    %cst_32 = arith.constant dense<0.000000e+00> : vector<128x128xf32>
    %51 = tpu.matmul %49, %50, %cst_32 {dimension_numbers = #tpu.dot_dimension_numbers<[1], [0], [0], [1], [0, 0, 1, 1], [], []>} : vector<128x128xf32>, vector<128x128xf32>, vector<128x128xf32> -> vector<128x128xf32>
    %c0_33 = arith.constant 0 : index
    %c0_34 = arith.constant 0 : index
    %52 = vector.load %arg4[%c0_33, %c0_34] : memref<1x128xf32, #tpu.memory_space<vmem>>, vector<1x128xf32>
    %53 = vector.broadcast %52 : vector<1x128xf32> to vector<128x128xf32>
    %54 = arith.addf %51, %53 : vector<128x128xf32>
    %c0_35 = arith.constant 0 : index
    %c0_36 = arith.constant 0 : index
    %c0_37 = arith.constant 0 : index
    %55 = vector.load %arg5[%c0_35, %c0_36, %c0_37] : memref<1x128x128xf32, #tpu.memory_space<vmem>>, vector<1x128x128xf32>
    %56 = vector.shape_cast %55 : vector<1x128x128xf32> to vector<128x128xf32>
    %57 = vector.shape_cast %54 : vector<128x128xf32> to vector<1x128x128xf32>
    tpu.vector_store %arg5[%c0_35, %c0_36, %c0_37], %57 {strides = array<i32>} : memref<1x128x128xf32, #tpu.memory_space<vmem>>, vector<1x128x128xf32>,
    return
  }
  func.func @transform_0(%arg0: i32, %arg1: i32) -> (i32, i32, i32) {
    %c0_i32 = arith.constant 0 : i32
    %c0_i32_0 = arith.constant 0 : i32
    %c0_i32_1 = arith.constant 0 : i32
    return %arg0, %c0_i32, %c0_i32_0 : i32, i32, i32
  }
  func.func @transform_1(%arg0: i32, %arg1: i32) -> (i32, i32) {
    %c0_i32 = arith.constant 0 : i32
    %c0_i32_0 = arith.constant 0 : i32
    %c0_i32_1 = arith.constant 0 : i32
    return %c0_i32, %c0_i32_0 : i32, i32
  }
  func.func @transform_2(%arg0: i32, %arg1: i32) -> (i32, i32) {
    %c0_i32 = arith.constant 0 : i32
    %c0_i32_0 = arith.constant 0 : i32
    %c0_i32_1 = arith.constant 0 : i32
    return %c0_i32, %c0_i32_0 : i32, i32
  }
  func.func @transform_3(%arg0: i32, %arg1: i32) -> (i32, i32, i32) {
    %c0_i32 = arith.constant 0 : i32
    %c0_i32_0 = arith.constant 0 : i32
    return %arg0, %arg1, %c0_i32 : i32, i32, i32
  }
}

</mosaic_0001>

<llo_original>
// kernel: concat_conv2d.1
$region0: #{concat_conv2d.1}
  #allocation0 [shape = 'u32[]', space=smem, size = 0x4, offset = 0x4, fixed_abs, tag = 'smem constant byte address 0x4 - core index']
  #allocation1 [shape = 'u32[144,128]{1,0:T(1,128)}', space=vmem, size = 0x12000, scoped, tag = 'internal scratch']
  #allocation2 [shape = 'f32[128,128]{1,0:T(8,128)}', space=vmem, size = 0x10000, scoped, tag = 'scratch operand']
  %s0 = inlined_call_operand.vmem [shape: f32[2,296,8], index: 0, kind: input, shape index: {}]
  %s1 = inlined_call_operand.vmem [shape: f32[128,128], index: 1, kind: input, shape index: {}]
  %s2 = inlined_call_operand.vmem [shape: f32[1,128], index: 2, kind: input, shape index: {}]
  %s3 = inlined_call_operand.vmem [shape: f32[2,256,128], index: 3, kind: output, shape index: {}]
  %s4 = sld [smem:[#allocation0]]
  $region45: #{concat_conv2d.1} parent=0
    _
  %s6 = ssub.s32 1, %s4
  %s7 = scalar_select 0, %s6, %s4
  loop: start=0, step=1, limit=6
  $region2: #{concat_conv2d.1} parent=0 // loop_pre_header
    _
  $region3: #{concat_conv2d.1} parent=0 // loop_header
    %s9 = sphi 0, %s13
    %p10 = scmp.ge.s32.totalorder %s9, 6
    %s16 = sphi 0, %s28
    %s17 = sphi 0, %s24
    %s18 = sphi 0, %s16
    %s19 = sphi 0, %s17
    %s20 = sphi 0, %s18
    %s21 = sphi 0, %s19
    %s31 = sphi 0, %s33
    %s34 = sphi 0, %s31
    %s35 = sphi 0, %s34
    %s51 = sphi 0, %s35
    %s55 = sphi 0, %s55
    %s57 = sphi 0, %s55
    %s58 = sphi 0, %s57
    %s72 = sphi 0, %s58
    %s76 = sphi 0, %s76
    %s78 = sphi 0, %s76
    %s79 = sphi 0, %s78
    %s93 = sphi 0, %s79
    %s101 = sphi 0, %s103
    %s104 = sphi 0, %s101
    %s105 = sphi 0, %s104
    %s121 = sphi 0, %s105
  $region4: #{concat_conv2d.1} parent=0 // loop_header_branch
    %12 = sbr.rel (%p10) target = $region8
  $region5: #{concat_conv2d.1} parent=0 // loop_body
    %s14 = ssub.s32 %s9, 1
    %s15 = ssub.s32 %s9, 2
    %s22 = sadd.s32 1, %s17
    %p23 = scmp.ge.s32.totalorder %s22, 2
    %s24 = scalar_select %p23, 0, %s22
    %s25 = sadd.s32 1, %s16
    %s26 = scalar_select %p23, %s25, %s16
    %p27 = scmp.ge.s32.totalorder %s26, 2
    %s28 = scalar_select %p27, 0, %s26
    %s29 = ssub.s32 %s16, %s28
    %p30 = scmp.eq.s32.totalorder %s29, 0
    %s32 = sadd.s32 %s31, 1
    %s33 = scalar_select %p30, %s31, %s32
    %p36 = pneg %p30
    %p37 = scmp.eq.s32.totalorder %s9, 3
    %p38 = por %p36, %p37
    %p39 = scmp.ne.s32.totalorder %s31, %s34
    %p40 = scmp.eq.s32.totalorder %s9, 0
    %p41 = por %p39, %p40
    %p42 = scmp.ne.s32.totalorder %s31, %s34
    %p43 = scmp.eq.s32.totalorder %s14, 3
    %p44 = por %p42, %p43
    %p45 = scmp.ne.s32.totalorder %s34, %s35
    %p46 = scmp.eq.s32.totalorder %s14, 0
    %p47 = por %p45, %p46
    %p48 = scmp.ne.s32.totalorder %s34, %s35
    %p49 = scmp.eq.s32.totalorder %s15, 3
    %p50 = por %p48, %p49
    %p52 = scmp.ne.s32.totalorder %s35, %s51
    %p53 = scmp.eq.s32.totalorder %s15, 0
    %p54 = por %p52, %p53
    %s56 = sadd.s32 %s55, 1
    %p59 = scmp.eq.s32.totalorder %s9, 3
    %p60 = scmp.ne.s32.totalorder %s55, %s57
    %p61 = scmp.eq.s32.totalorder %s9, 0
    %p62 = por %p60, %p61
    %p63 = scmp.ne.s32.totalorder %s55, %s57
    %p64 = scmp.eq.s32.totalorder %s14, 3
    %p65 = por %p63, %p64
    %p66 = scmp.ne.s32.totalorder %s57, %s58
    %p67 = scmp.eq.s32.totalorder %s14, 0
    %p68 = por %p66, %p67
    %p69 = scmp.ne.s32.totalorder %s57, %s58
    %p70 = scmp.eq.s32.totalorder %s15, 3
    %p71 = por %p69, %p70
    %p73 = scmp.ne.s32.totalorder %s58, %s72
    %p74 = scmp.eq.s32.totalorder %s15, 0
    %p75 = por %p73, %p74
    %s77 = sadd.s32 %s76, 1
    %p80 = scmp.eq.s32.totalorder %s9, 3
    %p81 = scmp.ne.s32.totalorder %s76, %s78
    %p82 = scmp.eq.s32.totalorder %s9, 0
    %p83 = por %p81, %p82
    %p84 = scmp.ne.s32.totalorder %s76, %s78
    %p85 = scmp.eq.s32.totalorder %s14, 3
    %p86 = por %p84, %p85
    %p87 = scmp.ne.s32.totalorder %s78, %s79
    %p88 = scmp.eq.s32.totalorder %s14, 0
    %p89 = por %p87, %p88
    %p90 = scmp.ne.s32.totalorder %s78, %s79
    %p91 = scmp.eq.s32.totalorder %s15, 3
    %p92 = por %p90, %p91
    %p94 = scmp.ne.s32.totalorder %s79, %s93
    %p95 = scmp.eq.s32.totalorder %s15, 0
    %p96 = por %p94, %p95
    %s97 = ssub.s32 %s16, %s28
    %s98 = ssub.s32 %s17, %s24
    %s99 = sor.u32 %s97, %s98
    %p100 = scmp.eq.s32.totalorder %s99, 0
    %s102 = sadd.s32 %s101, 1
    %s103 = scalar_select %p100, %s101, %s102
    %p106 = pneg %p100
    %p107 = scmp.eq.s32.totalorder %s9, 3
    %p108 = por %p106, %p107
    %p109 = scmp.ne.s32.totalorder %s101, %s104
    %p110 = scmp.eq.s32.totalorder %s9, 0
    %p111 = por %p109, %p110
    %p112 = scmp.ne.s32.totalorder %s101, %s104
    %p113 = scmp.eq.s32.totalorder %s14, 3
    %p114 = por %p112, %p113
    %p115 = scmp.ne.s32.totalorder %s104, %s105
    %p116 = scmp.eq.s32.totalorder %s14, 0
    %p117 = por %p115, %p116
    %p118 = scmp.ne.s32.totalorder %s104, %s105
    %p119 = scmp.eq.s32.totalorder %s15, 3
    %p120 = por %p118, %p119
    %p122 = scmp.ne.s32.totalorder %s105, %s121
    %p123 = scmp.eq.s32.totalorder %s15, 0
    %p124 = por %p122, %p123
    %p125 = scmp.le.s32.totalorder 1, %s9
    %p126 = scmp.lt.s32.totalorder %s9, 5
    %p127 = pnand %p125, %p126
    %p128 = pneg %p127
    // Predicated region
    $region9: #{concat_conv2d.1} parent=5 // pred_check
      _
    $region10: #{concat_conv2d.1} parent=5 // pred_check_branch
      %130 = sbr.rel (%p127) target = $region12
    $region11: #{concat_conv2d.1} parent=5 // pred_region
      %s131 = ssub.s32 %s9, 1
      // Predicated region
      $region13: #{concat_conv2d.1} parent=11 // pred_check
        %p132 = pneg %p68
      $region14: #{concat_conv2d.1} parent=11 // pred_check_branch
        %134 = sbr.rel (%p132) target = $region16
      $region15: #{concat_conv2d.1} parent=11 // pred_region
        _
      $region16: #{concat_conv2d.1} parent=11 // pred_fallthru
        _
      // Predicated region
      $region17: #{concat_conv2d.1} parent=11 // pred_check
        %p135 = pneg %p89
      $region18: #{concat_conv2d.1} parent=11 // pred_check_branch
        %137 = sbr.rel (%p135) target = $region20
      $region19: #{concat_conv2d.1} parent=11 // pred_region
        _
      $region20: #{concat_conv2d.1} parent=11 // pred_fallthru
        _
    $region12: #{concat_conv2d.1} parent=5 // pred_fallthru
      _
    %p138 = scmp.lt.s32.totalorder %s9, 4
    // Predicated region
    $region21: #{concat_conv2d.1} parent=5 // pred_check
      %p139 = pneg %p138
    $region22: #{concat_conv2d.1} parent=5 // pred_check_branch
      %141 = sbr.rel (%p139) target = $region24
    $region23: #{concat_conv2d.1} parent=5 // pred_region
      // Predicated region
      $region25: #{concat_conv2d.1} parent=23 // pred_check
        %p142 = pneg %p41
      $region26: #{concat_conv2d.1} parent=23 // pred_check_branch
        %144 = sbr.rel (%p142) target = $region28
      $region27: #{concat_conv2d.1} parent=23 // pred_region
        %p145 = scmp.lt.s32.totalorder %s16, 1
        %s146 = scalar_select %p145, %s16, 1
        %s147 = smul.addr %s146, 37
        %s148 = smul.addr %s147, 8
        %s149 = scalar_lea.vmem %s0, %s148
      $region28: #{concat_conv2d.1} parent=23 // pred_fallthru
        _
    $region24: #{concat_conv2d.1} parent=5 // pred_fallthru
      _
    %p150 = scmp.le.s32.totalorder 1, %s9
    %p151 = scmp.lt.s32.totalorder %s9, 5
    %p152 = pnand %p150, %p151
    %p153 = pneg %p152
    // Predicated region
    $region29: #{concat_conv2d.1} parent=5 // pred_check
      _
    $region30: #{concat_conv2d.1} parent=5 // pred_check_branch
      %155 = sbr.rel (%p152) target = $region32
    $region31: #{concat_conv2d.1} parent=5 // pred_region
      %s156 = ssub.s32 %s9, 1
      %p157 = scmp.lt.s32.totalorder %s18, 1
      %s158 = scalar_select %p157, %s18, 1
      %s159 = smul.addr %s158, 37
      %s160 = smul.addr %s159, 8
      %s161 = scalar_lea.vmem %s0, %s160
      %p162 = pneg %p47
      %p163 = pneg %p44
      %p164 = pneg %p68
      %p165 = pneg %p65
      %p166 = pneg %p89
      %p167 = pneg %p86
      %p168 = pneg %p117
      %p169 = pneg %p114
      %s170 = smul.u32 16, %s19
      %p171 = scmp.lt.s32.totalorder %s18, 1
      %s172 = scalar_select %p171, %s18, 1
      %p173 = scmp.lt.s32.totalorder %s170, 31
      %s174 = scalar_select %p173, %s170, 31
      %s175 = smul.addr %s172, 32
      %s176 = sadd.s32 %s174, %s175
      %s177 = smul.addr %s176, 8
      %s178 = scalar_lea.vmem %s3, %s177
      %p179 = scmp.lt.s32.totalorder %s18, 1
      %s180 = scalar_select %p179, %s18, 1
      %s181 = smul.addr %s180, 37
      %s182 = smul.addr %s181, 8
      %s183 = scalar_lea.vmem %s0, %s182
      %s184 = smul.u32 16, %s19
      %p185 = scmp.lt.s32.totalorder %s18, 1
      %s186 = scalar_select %p185, %s18, 1
      %p187 = scmp.lt.s32.totalorder %s184, 31
      %s188 = scalar_select %p187, %s184, 31
      %s189 = smul.addr %s186, 32
      %s190 = sadd.s32 %s188, %s189
      %s191 = smul.addr %s190, 8
      %s192 = scalar_lea.vmem %s3, %s191
      %s193 = smul.u32 16, %s19
      %s194 = smul.u32 %s19, 128
      %vm195 = vcmask 1048128
      %196 = vst.msk [vmem:[#allocation2] sm:$0xff] %vm195, 0.0
      %197 = vst.msk [vmem:[#allocation2 + $0x8] sm:$0xff] %vm195, 0.0
      %198 = vst.msk [vmem:[#allocation2 + $0x10] sm:$0xff] %vm195, 0.0
      %199 = vst.msk [vmem:[#allocation2 + $0x18] sm:$0xff] %vm195, 0.0
      %200 = vst.msk [vmem:[#allocation2 + $0x20] sm:$0xff] %vm195, 0.0
      %201 = vst.msk [vmem:[#allocation2 + $0x28] sm:$0xff] %vm195, 0.0
      %202 = vst.msk [vmem:[#allocation2 + $0x30] sm:$0xff] %vm195, 0.0
      %203 = vst.msk [vmem:[#allocation2 + $0x38] sm:$0xff] %vm195, 0.0
      %204 = vst.msk [vmem:[#allocation2 + $0x40] sm:$0xff] %vm195, 0.0
      %205 = vst.msk [vmem:[#allocation2 + $0x48] sm:$0xff] %vm195, 0.0
      %206 = vst.msk [vmem:[#allocation2 + $0x50] sm:$0xff] %vm195, 0.0
      %207 = vst.msk [vmem:[#allocation2 + $0x58] sm:$0xff] %vm195, 0.0
      %208 = vst.msk [vmem:[#allocation2 + $0x60] sm:$0xff] %vm195, 0.0
      %209 = vst.msk [vmem:[#allocation2 + $0x68] sm:$0xff] %vm195, 0.0
      %210 = vst.msk [vmem:[#allocation2 + $0x70] sm:$0xff] %vm195, 0.0
      %211 = vst.msk [vmem:[#allocation2 + $0x78] sm:$0xff] %vm195, 0.0
      %s212 = scalar_lea.vmem %s183, %s194
      %v213 = vld [vmem:[%s212] sm:$0xff]
      %v214 = vld [vmem:[%s212 + $0x8] sm:$0xff]
      %v215 = vld [vmem:[%s212 + $0x10] sm:$0xff]
      %v216 = vld [vmem:[%s212 + $0x18] sm:$0xff]
      %v217 = vld [vmem:[%s212 + $0x20] sm:$0xff]
      %v218 = vld [vmem:[%s212 + $0x28] sm:$0xff]
      %v219 = vld [vmem:[%s212 + $0x30] sm:$0xff]
      %v220 = vld [vmem:[%s212 + $0x38] sm:$0xff]
      %v221 = vld [vmem:[%s212 + $0x40] sm:$0xff]
      %v222 = vld [vmem:[%s212 + $0x48] sm:$0xff]
      %v223 = vld [vmem:[%s212 + $0x50] sm:$0xff]
      %v224 = vld [vmem:[%s212 + $0x58] sm:$0xff]
      %v225 = vld [vmem:[%s212 + $0x60] sm:$0xff]
      %v226 = vld [vmem:[%s212 + $0x68] sm:$0xff]
      %v227 = vld [vmem:[%s212 + $0x70] sm:$0xff]
      %v228 = vld [vmem:[%s212 + $0x78] sm:$0xff]
      %vm229 = vcmask 64512
      %230 = vst.msk [vmem:[#allocation2] sm:$0xff] %vm229, %v213
      %231 = vst.msk [vmem:[#allocation2 + $0x8] sm:$0xff] %vm229, %v214
      %232 = vst.msk [vmem:[#allocation2 + $0x10] sm:$0xff] %vm229, %v215
      %233 = vst.msk [vmem:[#allocation2 + $0x18] sm:$0xff] %vm229, %v216
      %234 = vst.msk [vmem:[#allocation2 + $0x20] sm:$0xff] %vm229, %v217
      %235 = vst.msk [vmem:[#allocation2 + $0x28] sm:$0xff] %vm229, %v218
      %236 = vst.msk [vmem:[#allocation2 + $0x30] sm:$0xff] %vm229, %v219
      %237 = vst.msk [vmem:[#allocation2 + $0x38] sm:$0xff] %vm229, %v220
      %238 = vst.msk [vmem:[#allocation2 + $0x40] sm:$0xff] %vm229, %v221
      %239 = vst.msk [vmem:[#allocation2 + $0x48] sm:$0xff] %vm229, %v222
      %240 = vst.msk [vmem:[#allocation2 + $0x50] sm:$0xff] %vm229, %v223
      %241 = vst.msk [vmem:[#allocation2 + $0x58] sm:$0xff] %vm229, %v224
      %242 = vst.msk [vmem:[#allocation2 + $0x60] sm:$0xff] %vm229, %v225
      %243 = vst.msk [vmem:[#allocation2 + $0x68] sm:$0xff] %vm229, %v226
      %244 = vst.msk [vmem:[#allocation2 + $0x70] sm:$0xff] %vm229, %v227
      %245 = vst.msk [vmem:[#allocation2 + $0x78] sm:$0xff] %vm229, %v228
      %s246 = sadd.s32 %s194, 1
      %s247 = scalar_lea.vmem %s183, %s246
      %v248 = vld [vmem:[%s247] sm:$0xff]
      %v249 = vld [vmem:[%s247 + $0x8] sm:$0xff]
      %v250 = vld [vmem:[%s247 + $0x10] sm:$0xff]
      %v251 = vld [vmem:[%s247 + $0x18] sm:$0xff]
      %v252 = vld [vmem:[%s247 + $0x20] sm:$0xff]
      %v253 = vld [vmem:[%s247 + $0x28] sm:$0xff]
      %v254 = vld [vmem:[%s247 + $0x30] sm:$0xff]
      %v255 = vld [vmem:[%s247 + $0x38] sm:$0xff]
      %v256 = vld [vmem:[%s247 + $0x40] sm:$0xff]
      %v257 = vld [vmem:[%s247 + $0x48] sm:$0xff]
      %v258 = vld [vmem:[%s247 + $0x50] sm:$0xff]
      %v259 = vld [vmem:[%s247 + $0x58] sm:$0xff]
      %v260 = vld [vmem:[%s247 + $0x60] sm:$0xff]
      %v261 = vld [vmem:[%s247 + $0x68] sm:$0xff]
      %v262 = vld [vmem:[%s247 + $0x70] sm:$0xff]
      %v263 = vld [vmem:[%s247 + $0x78] sm:$0xff]
      %280 = vrot.lane.b32.xlu0 %v248, 8
      %v281 = vpop.permute.xlu0 %280
      %282 = vrot.lane.b32.xlu0 %v249, 8
      %v283 = vpop.permute.xlu0 %282
      %284 = vrot.lane.b32.xlu0 %v250, 8
      %v285 = vpop.permute.xlu0 %284
      %286 = vrot.lane.b32.xlu0 %v251, 8
      %v287 = vpop.permute.xlu0 %286
      %288 = vrot.lane.b32.xlu0 %v252, 8
      %v289 = vpop.permute.xlu0 %288
      %290 = vrot.lane.b32.xlu0 %v253, 8
      %v291 = vpop.permute.xlu0 %290
      %292 = vrot.lane.b32.xlu0 %v254, 8
      %v293 = vpop.permute.xlu0 %292
      %294 = vrot.lane.b32.xlu0 %v255, 8
      %v295 = vpop.permute.xlu0 %294
      %296 = vrot.lane.b32.xlu0 %v256, 8
      %v297 = vpop.permute.xlu0 %296
      %298 = vrot.lane.b32.xlu0 %v257, 8
      %v299 = vpop.permute.xlu0 %298
      %300 = vrot.lane.b32.xlu0 %v258, 8
      %v301 = vpop.permute.xlu0 %300
      %302 = vrot.lane.b32.xlu0 %v259, 8
      %v303 = vpop.permute.xlu0 %302
      %304 = vrot.lane.b32.xlu0 %v260, 8
      %v305 = vpop.permute.xlu0 %304
      %306 = vrot.lane.b32.xlu0 %v261, 8
      %v307 = vpop.permute.xlu0 %306
      %308 = vrot.lane.b32.xlu0 %v262, 8
      %v309 = vpop.permute.xlu0 %308
      %310 = vrot.lane.b32.xlu0 %v263, 8
      %v311 = vpop.permute.xlu0 %310
      %vm328 = vcmask 130112
      %329 = vst.msk [vmem:[#allocation2] sm:$0xff] %vm328, %v281
      %330 = vst.msk [vmem:[#allocation2 + $0x8] sm:$0xff] %vm328, %v283
      %331 = vst.msk [vmem:[#allocation2 + $0x10] sm:$0xff] %vm328, %v285
      %332 = vst.msk [vmem:[#allocation2 + $0x18] sm:$0xff] %vm328, %v287
      %333 = vst.msk [vmem:[#allocation2 + $0x20] sm:$0xff] %vm328, %v289
      %334 = vst.msk [vmem:[#allocation2 + $0x28] sm:$0xff] %vm328, %v291
      %335 = vst.msk [vmem:[#allocation2 + $0x30] sm:$0xff] %vm328, %v293
      %336 = vst.msk [vmem:[#allocation2 + $0x38] sm:$0xff] %vm328, %v295
      %337 = vst.msk [vmem:[#allocation2 + $0x40] sm:$0xff] %vm328, %v297
      %338 = vst.msk [vmem:[#allocation2 + $0x48] sm:$0xff] %vm328, %v299
      %339 = vst.msk [vmem:[#allocation2 + $0x50] sm:$0xff] %vm328, %v301
      %340 = vst.msk [vmem:[#allocation2 + $0x58] sm:$0xff] %vm328, %v303
      %341 = vst.msk [vmem:[#allocation2 + $0x60] sm:$0xff] %vm328, %v305
      %342 = vst.msk [vmem:[#allocation2 + $0x68] sm:$0xff] %vm328, %v307
      %343 = vst.msk [vmem:[#allocation2 + $0x70] sm:$0xff] %vm328, %v309
      %344 = vst.msk [vmem:[#allocation2 + $0x78] sm:$0xff] %vm328, %v311
      %s345 = sadd.s32 %s194, 2
      %s346 = scalar_lea.vmem %s183, %s345
      %v347 = vld [vmem:[%s346] sm:$0xff]
      %v348 = vld [vmem:[%s346 + $0x8] sm:$0xff]
      %v349 = vld [vmem:[%s346 + $0x10] sm:$0xff]
      %v350 = vld [vmem:[%s346 + $0x18] sm:$0xff]
      %v351 = vld [vmem:[%s346 + $0x20] sm:$0xff]
      %v352 = vld [vmem:[%s346 + $0x28] sm:$0xff]
      %v353 = vld [vmem:[%s346 + $0x30] sm:$0xff]
      %v354 = vld [vmem:[%s346 + $0x38] sm:$0xff]
      %v355 = vld [vmem:[%s346 + $0x40] sm:$0xff]
      %v356 = vld [vmem:[%s346 + $0x48] sm:$0xff]
      %v357 = vld [vmem:[%s346 + $0x50] sm:$0xff]
      %v358 = vld [vmem:[%s346 + $0x58] sm:$0xff]
      %v359 = vld [vmem:[%s346 + $0x60] sm:$0xff]
      %v360 = vld [vmem:[%s346 + $0x68] sm:$0xff]
      %v361 = vld [vmem:[%s346 + $0x70] sm:$0xff]
      %v362 = vld [vmem:[%s346 + $0x78] sm:$0xff]
      %379 = vrot.lane.b32.xlu0 %v347, 16
      %v380 = vpop.permute.xlu0 %379
      %381 = vrot.lane.b32.xlu0 %v348, 16
      %v382 = vpop.permute.xlu0 %381
      %383 = vrot.lane.b32.xlu0 %v349, 16
      %v384 = vpop.permute.xlu0 %383
      %385 = vrot.lane.b32.xlu0 %v350, 16
      %v386 = vpop.permute.xlu0 %385
      %387 = vrot.lane.b32.xlu0 %v351, 16
      %v388 = vpop.permute.xlu0 %387
      %389 = vrot.lane.b32.xlu0 %v352, 16
      %v390 = vpop.permute.xlu0 %389
      %391 = vrot.lane.b32.xlu0 %v353, 16
      %v392 = vpop.permute.xlu0 %391
      %393 = vrot.lane.b32.xlu0 %v354, 16
      %v394 = vpop.permute.xlu0 %393
      %395 = vrot.lane.b32.xlu0 %v355, 16
      %v396 = vpop.permute.xlu0 %395
      %397 = vrot.lane.b32.xlu0 %v356, 16
      %v398 = vpop.permute.xlu0 %397
      %399 = vrot.lane.b32.xlu0 %v357, 16
      %v400 = vpop.permute.xlu0 %399
      %401 = vrot.lane.b32.xlu0 %v358, 16
      %v402 = vpop.permute.xlu0 %401
      %403 = vrot.lane.b32.xlu0 %v359, 16
      %v404 = vpop.permute.xlu0 %403
      %405 = vrot.lane.b32.xlu0 %v360, 16
      %v406 = vpop.permute.xlu0 %405
      %407 = vrot.lane.b32.xlu0 %v361, 16
      %v408 = vpop.permute.xlu0 %407
      %409 = vrot.lane.b32.xlu0 %v362, 16
      %v410 = vpop.permute.xlu0 %409
      %vm427 = vcmask 195712
      %428 = vst.msk [vmem:[#allocation2] sm:$0xff] %vm427, %v380
      %429 = vst.msk [vmem:[#allocation2 + $0x8] sm:$0xff] %vm427, %v382
      %430 = vst.msk [vmem:[#allocation2 + $0x10] sm:$0xff] %vm427, %v384
      %431 = vst.msk [vmem:[#allocation2 + $0x18] sm:$0xff] %vm427, %v386
      %432 = vst.msk [vmem:[#allocation2 + $0x20] sm:$0xff] %vm427, %v388
      %433 = vst.msk [vmem:[#allocation2 + $0x28] sm:$0xff] %vm427, %v390
      %434 = vst.msk [vmem:[#allocation2 + $0x30] sm:$0xff] %vm427, %v392
      %435 = vst.msk [vmem:[#allocation2 + $0x38] sm:$0xff] %vm427, %v394
      %436 = vst.msk [vmem:[#allocation2 + $0x40] sm:$0xff] %vm427, %v396
      %437 = vst.msk [vmem:[#allocation2 + $0x48] sm:$0xff] %vm427, %v398
      %438 = vst.msk [vmem:[#allocation2 + $0x50] sm:$0xff] %vm427, %v400
      %439 = vst.msk [vmem:[#allocation2 + $0x58] sm:$0xff] %vm427, %v402
      %440 = vst.msk [vmem:[#allocation2 + $0x60] sm:$0xff] %vm427, %v404
      %441 = vst.msk [vmem:[#allocation2 + $0x68] sm:$0xff] %vm427, %v406
      %442 = vst.msk [vmem:[#allocation2 + $0x70] sm:$0xff] %vm427, %v408
      %443 = vst.msk [vmem:[#allocation2 + $0x78] sm:$0xff] %vm427, %v410
      %s444 = sadd.s32 %s194, 16
      %s445 = scalar_lea.vmem %s183, %s444
      %v446 = vld [vmem:[%s445] sm:$0xff]
      %v447 = vld [vmem:[%s445 + $0x8] sm:$0xff]
      %v448 = vld [vmem:[%s445 + $0x10] sm:$0xff]
      %v449 = vld [vmem:[%s445 + $0x18] sm:$0xff]
      %v450 = vld [vmem:[%s445 + $0x20] sm:$0xff]
      %v451 = vld [vmem:[%s445 + $0x28] sm:$0xff]
      %v452 = vld [vmem:[%s445 + $0x30] sm:$0xff]
      %v453 = vld [vmem:[%s445 + $0x38] sm:$0xff]
      %v454 = vld [vmem:[%s445 + $0x40] sm:$0xff]
      %v455 = vld [vmem:[%s445 + $0x48] sm:$0xff]
      %v456 = vld [vmem:[%s445 + $0x50] sm:$0xff]
      %v457 = vld [vmem:[%s445 + $0x58] sm:$0xff]
      %v458 = vld [vmem:[%s445 + $0x60] sm:$0xff]
      %v459 = vld [vmem:[%s445 + $0x68] sm:$0xff]
      %v460 = vld [vmem:[%s445 + $0x70] sm:$0xff]
      %v461 = vld [vmem:[%s445 + $0x78] sm:$0xff]
      %478 = vrot.lane.b32.xlu0 %v446, 24
      %v479 = vpop.permute.xlu0 %478
      %480 = vrot.lane.b32.xlu0 %v447, 24
      %v481 = vpop.permute.xlu0 %480
      %482 = vrot.lane.b32.xlu0 %v448, 24
      %v483 = vpop.permute.xlu0 %482
      %484 = vrot.lane.b32.xlu0 %v449, 24
      %v485 = vpop.permute.xlu0 %484
      %486 = vrot.lane.b32.xlu0 %v450, 24
      %v487 = vpop.permute.xlu0 %486
      %488 = vrot.lane.b32.xlu0 %v451, 24
      %v489 = vpop.permute.xlu0 %488
      %490 = vrot.lane.b32.xlu0 %v452, 24
      %v491 = vpop.permute.xlu0 %490
      %492 = vrot.lane.b32.xlu0 %v453, 24
      %v493 = vpop.permute.xlu0 %492
      %494 = vrot.lane.b32.xlu0 %v454, 24
      %v495 = vpop.permute.xlu0 %494
      %496 = vrot.lane.b32.xlu0 %v455, 24
      %v497 = vpop.permute.xlu0 %496
      %498 = vrot.lane.b32.xlu0 %v456, 24
      %v499 = vpop.permute.xlu0 %498
      %500 = vrot.lane.b32.xlu0 %v457, 24
      %v501 = vpop.permute.xlu0 %500
      %502 = vrot.lane.b32.xlu0 %v458, 24
      %v503 = vpop.permute.xlu0 %502
      %504 = vrot.lane.b32.xlu0 %v459, 24
      %v505 = vpop.permute.xlu0 %504
      %506 = vrot.lane.b32.xlu0 %v460, 24
      %v507 = vpop.permute.xlu0 %506
      %508 = vrot.lane.b32.xlu0 %v461, 24
      %v509 = vpop.permute.xlu0 %508
      %vm526 = vcmask 261312
      %527 = vst.msk [vmem:[#allocation2] sm:$0xff] %vm526, %v479
      %528 = vst.msk [vmem:[#allocation2 + $0x8] sm:$0xff] %vm526, %v481
      %529 = vst.msk [vmem:[#allocation2 + $0x10] sm:$0xff] %vm526, %v483
      %530 = vst.msk [vmem:[#allocation2 + $0x18] sm:$0xff] %vm526, %v485
      %531 = vst.msk [vmem:[#allocation2 + $0x20] sm:$0xff] %vm526, %v487
      %532 = vst.msk [vmem:[#allocation2 + $0x28] sm:$0xff] %vm526, %v489
      %533 = vst.msk [vmem:[#allocation2 + $0x30] sm:$0xff] %vm526, %v491
      %534 = vst.msk [vmem:[#allocation2 + $0x38] sm:$0xff] %vm526, %v493
      %535 = vst.msk [vmem:[#allocation2 + $0x40] sm:$0xff] %vm526, %v495
      %536 = vst.msk [vmem:[#allocation2 + $0x48] sm:$0xff] %vm526, %v497
      %537 = vst.msk [vmem:[#allocation2 + $0x50] sm:$0xff] %vm526, %v499
      %538 = vst.msk [vmem:[#allocation2 + $0x58] sm:$0xff] %vm526, %v501
      %539 = vst.msk [vmem:[#allocation2 + $0x60] sm:$0xff] %vm526, %v503
      %540 = vst.msk [vmem:[#allocation2 + $0x68] sm:$0xff] %vm526, %v505
      %541 = vst.msk [vmem:[#allocation2 + $0x70] sm:$0xff] %vm526, %v507
      %542 = vst.msk [vmem:[#allocation2 + $0x78] sm:$0xff] %vm526, %v509
      %s543 = sadd.s32 %s194, 17
      %s544 = scalar_lea.vmem %s183, %s543
      %v545 = vld [vmem:[%s544] sm:$0xff]
      %v546 = vld [vmem:[%s544 + $0x8] sm:$0xff]
      %v547 = vld [vmem:[%s544 + $0x10] sm:$0xff]
      %v548 = vld [vmem:[%s544 + $0x18] sm:$0xff]
      %v549 = vld [vmem:[%s544 + $0x20] sm:$0xff]
      %v550 = vld [vmem:[%s544 + $0x28] sm:$0xff]
      %v551 = vld [vmem:[%s544 + $0x30] sm:$0xff]
      %v552 = vld [vmem:[%s544 + $0x38] sm:$0xff]
      %v553 = vld [vmem:[%s544 + $0x40] sm:$0xff]
      %v554 = vld [vmem:[%s544 + $0x48] sm:$0xff]
      %v555 = vld [vmem:[%s544 + $0x50] sm:$0xff]
      %v556 = vld [vmem:[%s544 + $0x58] sm:$0xff]
      %v557 = vld [vmem:[%s544 + $0x60] sm:$0xff]
      %v558 = vld [vmem:[%s544 + $0x68] sm:$0xff]
      %v559 = vld [vmem:[%s544 + $0x70] sm:$0xff]
      %v560 = vld [vmem:[%s544 + $0x78] sm:$0xff]
      %577 = vrot.lane.b32.xlu0 %v545, 32
      %v578 = vpop.permute.xlu0 %577
      %579 = vrot.lane.b32.xlu0 %v546, 32
      %v580 = vpop.permute.xlu0 %579
      %581 = vrot.lane.b32.xlu0 %v547, 32
      %v582 = vpop.permute.xlu0 %581
      %583 = vrot.lane.b32.xlu0 %v548, 32
      %v584 = vpop.permute.xlu0 %583
      %585 = vrot.lane.b32.xlu0 %v549, 32
      %v586 = vpop.permute.xlu0 %585
      %587 = vrot.lane.b32.xlu0 %v550, 32
      %v588 = vpop.permute.xlu0 %587
      %589 = vrot.lane.b32.xlu0 %v551, 32
      %v590 = vpop.permute.xlu0 %589
      %591 = vrot.lane.b32.xlu0 %v552, 32
      %v592 = vpop.permute.xlu0 %591
      %593 = vrot.lane.b32.xlu0 %v553, 32
      %v594 = vpop.permute.xlu0 %593
      %595 = vrot.lane.b32.xlu0 %v554, 32
      %v596 = vpop.permute.xlu0 %595
      %597 = vrot.lane.b32.xlu0 %v555, 32
      %v598 = vpop.permute.xlu0 %597
      %599 = vrot.lane.b32.xlu0 %v556, 32
      %v600 = vpop.permute.xlu0 %599
      %601 = vrot.lane.b32.xlu0 %v557, 32
      %v602 = vpop.permute.xlu0 %601
      %603 = vrot.lane.b32.xlu0 %v558, 32
      %v604 = vpop.permute.xlu0 %603
      %605 = vrot.lane.b32.xlu0 %v559, 32
      %v606 = vpop.permute.xlu0 %605
      %607 = vrot.lane.b32.xlu0 %v560, 32
      %v608 = vpop.permute.xlu0 %607
      %vm625 = vcmask 326912
      %626 = vst.msk [vmem:[#allocation2] sm:$0xff] %vm625, %v578
      %627 = vst.msk [vmem:[#allocation2 + $0x8] sm:$0xff] %vm625, %v580
      %628 = vst.msk [vmem:[#allocation2 + $0x10] sm:$0xff] %vm625, %v582
      %629 = vst.msk [vmem:[#allocation2 + $0x18] sm:$0xff] %vm625, %v584
      %630 = vst.msk [vmem:[#allocation2 + $0x20] sm:$0xff] %vm625, %v586
      %631 = vst.msk [vmem:[#allocation2 + $0x28] sm:$0xff] %vm625, %v588
      %632 = vst.msk [vmem:[#allocation2 + $0x30] sm:$0xff] %vm625, %v590
      %633 = vst.msk [vmem:[#allocation2 + $0x38] sm:$0xff] %vm625, %v592
      %634 = vst.msk [vmem:[#allocation2 + $0x40] sm:$0xff] %vm625, %v594
      %635 = vst.msk [vmem:[#allocation2 + $0x48] sm:$0xff] %vm625, %v596
      %636 = vst.msk [vmem:[#allocation2 + $0x50] sm:$0xff] %vm625, %v598
      %637 = vst.msk [vmem:[#allocation2 + $0x58] sm:$0xff] %vm625, %v600
      %638 = vst.msk [vmem:[#allocation2 + $0x60] sm:$0xff] %vm625, %v602
      %639 = vst.msk [vmem:[#allocation2 + $0x68] sm:$0xff] %vm625, %v604
      %640 = vst.msk [vmem:[#allocation2 + $0x70] sm:$0xff] %vm625, %v606
      %641 = vst.msk [vmem:[#allocation2 + $0x78] sm:$0xff] %vm625, %v608
      %s642 = sadd.s32 %s194, 18
      %s643 = scalar_lea.vmem %s183, %s642
      %v644 = vld [vmem:[%s643] sm:$0xff]
      %v645 = vld [vmem:[%s643 + $0x8] sm:$0xff]
      %v646 = vld [vmem:[%s643 + $0x10] sm:$0xff]
      %v647 = vld [vmem:[%s643 + $0x18] sm:$0xff]
      %v648 = vld [vmem:[%s643 + $0x20] sm:$0xff]
      %v649 = vld [vmem:[%s643 + $0x28] sm:$0xff]
      %v650 = vld [vmem:[%s643 + $0x30] sm:$0xff]
      %v651 = vld [vmem:[%s643 + $0x38] sm:$0xff]
      %v652 = vld [vmem:[%s643 + $0x40] sm:$0xff]
      %v653 = vld [vmem:[%s643 + $0x48] sm:$0xff]
      %v654 = vld [vmem:[%s643 + $0x50] sm:$0xff]
      %v655 = vld [vmem:[%s643 + $0x58] sm:$0xff]
      %v656 = vld [vmem:[%s643 + $0x60] sm:$0xff]
      %v657 = vld [vmem:[%s643 + $0x68] sm:$0xff]
      %v658 = vld [vmem:[%s643 + $0x70] sm:$0xff]
      %v659 = vld [vmem:[%s643 + $0x78] sm:$0xff]
      %676 = vrot.lane.b32.xlu0 %v644, 40
      %v677 = vpop.permute.xlu0 %676
      %678 = vrot.lane.b32.xlu0 %v645, 40
      %v679 = vpop.permute.xlu0 %678
      %680 = vrot.lane.b32.xlu0 %v646, 40
      %v681 = vpop.permute.xlu0 %680
      %682 = vrot.lane.b32.xlu0 %v647, 40
      %v683 = vpop.permute.xlu0 %682
      %684 = vrot.lane.b32.xlu0 %v648, 40
      %v685 = vpop.permute.xlu0 %684
      %686 = vrot.lane.b32.xlu0 %v649, 40
      %v687 = vpop.permute.xlu0 %686
      %688 = vrot.lane.b32.xlu0 %v650, 40
      %v689 = vpop.permute.xlu0 %688
      %690 = vrot.lane.b32.xlu0 %v651, 40
      %v691 = vpop.permute.xlu0 %690
      %692 = vrot.lane.b32.xlu0 %v652, 40
      %v693 = vpop.permute.xlu0 %692
      %694 = vrot.lane.b32.xlu0 %v653, 40
      %v695 = vpop.permute.xlu0 %694
      %696 = vrot.lane.b32.xlu0 %v654, 40
      %v697 = vpop.permute.xlu0 %696
      %698 = vrot.lane.b32.xlu0 %v655, 40
      %v699 = vpop.permute.xlu0 %698
      %700 = vrot.lane.b32.xlu0 %v656, 40
      %v701 = vpop.permute.xlu0 %700
      %702 = vrot.lane.b32.xlu0 %v657, 40
      %v703 = vpop.permute.xlu0 %702
      %704 = vrot.lane.b32.xlu0 %v658, 40
      %v705 = vpop.permute.xlu0 %704
      %706 = vrot.lane.b32.xlu0 %v659, 40
      %v707 = vpop.permute.xlu0 %706
      %vm724 = vcmask 392512
      %725 = vst.msk [vmem:[#allocation2] sm:$0xff] %vm724, %v677
      %726 = vst.msk [vmem:[#allocation2 + $0x8] sm:$0xff] %vm724, %v679
      %727 = vst.msk [vmem:[#allocation2 + $0x10] sm:$0xff] %vm724, %v681
      %728 = vst.msk [vmem:[#allocation2 + $0x18] sm:$0xff] %vm724, %v683
      %729 = vst.msk [vmem:[#allocation2 + $0x20] sm:$0xff] %vm724, %v685
      %730 = vst.msk [vmem:[#allocation2 + $0x28] sm:$0xff] %vm724, %v687
      %731 = vst.msk [vmem:[#allocation2 + $0x30] sm:$0xff] %vm724, %v689
      %732 = vst.msk [vmem:[#allocation2 + $0x38] sm:$0xff] %vm724, %v691
      %733 = vst.msk [vmem:[#allocation2 + $0x40] sm:$0xff] %vm724, %v693
      %734 = vst.msk [vmem:[#allocation2 + $0x48] sm:$0xff] %vm724, %v695
      %735 = vst.msk [vmem:[#allocation2 + $0x50] sm:$0xff] %vm724, %v697
      %736 = vst.msk [vmem:[#allocation2 + $0x58] sm:$0xff] %vm724, %v699
      %737 = vst.msk [vmem:[#allocation2 + $0x60] sm:$0xff] %vm724, %v701
      %738 = vst.msk [vmem:[#allocation2 + $0x68] sm:$0xff] %vm724, %v703
      %739 = vst.msk [vmem:[#allocation2 + $0x70] sm:$0xff] %vm724, %v705
      %740 = vst.msk [vmem:[#allocation2 + $0x78] sm:$0xff] %vm724, %v707
      %s741 = sadd.s32 %s194, 32
      %s742 = scalar_lea.vmem %s183, %s741
      %v743 = vld [vmem:[%s742] sm:$0xff]
      %v744 = vld [vmem:[%s742 + $0x8] sm:$0xff]
      %v745 = vld [vmem:[%s742 + $0x10] sm:$0xff]
      %v746 = vld [vmem:[%s742 + $0x18] sm:$0xff]
      %v747 = vld [vmem:[%s742 + $0x20] sm:$0xff]
      %v748 = vld [vmem:[%s742 + $0x28] sm:$0xff]
      %v749 = vld [vmem:[%s742 + $0x30] sm:$0xff]
      %v750 = vld [vmem:[%s742 + $0x38] sm:$0xff]
      %v751 = vld [vmem:[%s742 + $0x40] sm:$0xff]
      %v752 = vld [vmem:[%s742 + $0x48] sm:$0xff]
      %v753 = vld [vmem:[%s742 + $0x50] sm:$0xff]
      %v754 = vld [vmem:[%s742 + $0x58] sm:$0xff]
      %v755 = vld [vmem:[%s742 + $0x60] sm:$0xff]
      %v756 = vld [vmem:[%s742 + $0x68] sm:$0xff]
      %v757 = vld [vmem:[%s742 + $0x70] sm:$0xff]
      %v758 = vld [vmem:[%s742 + $0x78] sm:$0xff]
      %775 = vrot.lane.b32.xlu0 %v743, 48
      %v776 = vpop.permute.xlu0 %775
      %777 = vrot.lane.b32.xlu0 %v744, 48
      %v778 = vpop.permute.xlu0 %777
      %779 = vrot.lane.b32.xlu0 %v745, 48
      %v780 = vpop.permute.xlu0 %779
      %781 = vrot.lane.b32.xlu0 %v746, 48
      %v782 = vpop.permute.xlu0 %781
      %783 = vrot.lane.b32.xlu0 %v747, 48
      %v784 = vpop.permute.xlu0 %783
      %785 = vrot.lane.b32.xlu0 %v748, 48
      %v786 = vpop.permute.xlu0 %785
      %787 = vrot.lane.b32.xlu0 %v749, 48
      %v788 = vpop.permute.xlu0 %787
      %789 = vrot.lane.b32.xlu0 %v750, 48
      %v790 = vpop.permute.xlu0 %789
      %791 = vrot.lane.b32.xlu0 %v751, 48
      %v792 = vpop.permute.xlu0 %791
      %793 = vrot.lane.b32.xlu0 %v752, 48
      %v794 = vpop.permute.xlu0 %793
      %795 = vrot.lane.b32.xlu0 %v753, 48
      %v796 = vpop.permute.xlu0 %795
      %797 = vrot.lane.b32.xlu0 %v754, 48
      %v798 = vpop.permute.xlu0 %797
      %799 = vrot.lane.b32.xlu0 %v755, 48
      %v800 = vpop.permute.xlu0 %799
      %801 = vrot.lane.b32.xlu0 %v756, 48
      %v802 = vpop.permute.xlu0 %801
      %803 = vrot.lane.b32.xlu0 %v757, 48
      %v804 = vpop.permute.xlu0 %803
      %805 = vrot.lane.b32.xlu0 %v758, 48
      %v806 = vpop.permute.xlu0 %805
      %vm823 = vcmask 458112
      %824 = vst.msk [vmem:[#allocation2] sm:$0xff] %vm823, %v776
      %825 = vst.msk [vmem:[#allocation2 + $0x8] sm:$0xff] %vm823, %v778
      %826 = vst.msk [vmem:[#allocation2 + $0x10] sm:$0xff] %vm823, %v780
      %827 = vst.msk [vmem:[#allocation2 + $0x18] sm:$0xff] %vm823, %v782
      %828 = vst.msk [vmem:[#allocation2 + $0x20] sm:$0xff] %vm823, %v784
      %829 = vst.msk [vmem:[#allocation2 + $0x28] sm:$0xff] %vm823, %v786
      %830 = vst.msk [vmem:[#allocation2 + $0x30] sm:$0xff] %vm823, %v788
      %831 = vst.msk [vmem:[#allocation2 + $0x38] sm:$0xff] %vm823, %v790
      %832 = vst.msk [vmem:[#allocation2 + $0x40] sm:$0xff] %vm823, %v792
      %833 = vst.msk [vmem:[#allocation2 + $0x48] sm:$0xff] %vm823, %v794
      %834 = vst.msk [vmem:[#allocation2 + $0x50] sm:$0xff] %vm823, %v796
      %835 = vst.msk [vmem:[#allocation2 + $0x58] sm:$0xff] %vm823, %v798
      %836 = vst.msk [vmem:[#allocation2 + $0x60] sm:$0xff] %vm823, %v800
      %837 = vst.msk [vmem:[#allocation2 + $0x68] sm:$0xff] %vm823, %v802
      %838 = vst.msk [vmem:[#allocation2 + $0x70] sm:$0xff] %vm823, %v804
      %839 = vst.msk [vmem:[#allocation2 + $0x78] sm:$0xff] %vm823, %v806
      %s840 = sadd.s32 %s194, 33
      %s841 = scalar_lea.vmem %s183, %s840
      %v842 = vld [vmem:[%s841] sm:$0xff]
      %v843 = vld [vmem:[%s841 + $0x8] sm:$0xff]
      %v844 = vld [vmem:[%s841 + $0x10] sm:$0xff]
      %v845 = vld [vmem:[%s841 + $0x18] sm:$0xff]
      %v846 = vld [vmem:[%s841 + $0x20] sm:$0xff]
      %v847 = vld [vmem:[%s841 + $0x28] sm:$0xff]
      %v848 = vld [vmem:[%s841 + $0x30] sm:$0xff]
      %v849 = vld [vmem:[%s841 + $0x38] sm:$0xff]
      %v850 = vld [vmem:[%s841 + $0x40] sm:$0xff]
      %v851 = vld [vmem:[%s841 + $0x48] sm:$0xff]
      %v852 = vld [vmem:[%s841 + $0x50] sm:$0xff]
      %v853 = vld [vmem:[%s841 + $0x58] sm:$0xff]
      %v854 = vld [vmem:[%s841 + $0x60] sm:$0xff]
      %v855 = vld [vmem:[%s841 + $0x68] sm:$0xff]
      %v856 = vld [vmem:[%s841 + $0x70] sm:$0xff]
      %v857 = vld [vmem:[%s841 + $0x78] sm:$0xff]
      %874 = vrot.lane.b32.xlu0 %v842, 56
      %v875 = vpop.permute.xlu0 %874
      %876 = vrot.lane.b32.xlu0 %v843, 56
      %v877 = vpop.permute.xlu0 %876
      %878 = vrot.lane.b32.xlu0 %v844, 56
      %v879 = vpop.permute.xlu0 %878
      %880 = vrot.lane.b32.xlu0 %v845, 56
      %v881 = vpop.permute.xlu0 %880
      %882 = vrot.lane.b32.xlu0 %v846, 56
      %v883 = vpop.permute.xlu0 %882
      %884 = vrot.lane.b32.xlu0 %v847, 56
      %v885 = vpop.permute.xlu0 %884
      %886 = vrot.lane.b32.xlu0 %v848, 56
      %v887 = vpop.permute.xlu0 %886
      %888 = vrot.lane.b32.xlu0 %v849, 56
      %v889 = vpop.permute.xlu0 %888
      %890 = vrot.lane.b32.xlu0 %v850, 56
      %v891 = vpop.permute.xlu0 %890
      %892 = vrot.lane.b32.xlu0 %v851, 56
      %v893 = vpop.permute.xlu0 %892
      %894 = vrot.lane.b32.xlu0 %v852, 56
      %v895 = vpop.permute.xlu0 %894
      %896 = vrot.lane.b32.xlu0 %v853, 56
      %v897 = vpop.permute.xlu0 %896
      %898 = vrot.lane.b32.xlu0 %v854, 56
      %v899 = vpop.permute.xlu0 %898
      %900 = vrot.lane.b32.xlu0 %v855, 56
      %v901 = vpop.permute.xlu0 %900
      %902 = vrot.lane.b32.xlu0 %v856, 56
      %v903 = vpop.permute.xlu0 %902
      %904 = vrot.lane.b32.xlu0 %v857, 56
      %v905 = vpop.permute.xlu0 %904
      %vm922 = vcmask 523712
      %923 = vst.msk [vmem:[#allocation2] sm:$0xff] %vm922, %v875
      %924 = vst.msk [vmem:[#allocation2 + $0x8] sm:$0xff] %vm922, %v877
      %925 = vst.msk [vmem:[#allocation2 + $0x10] sm:$0xff] %vm922, %v879
      %926 = vst.msk [vmem:[#allocation2 + $0x18] sm:$0xff] %vm922, %v881
      %927 = vst.msk [vmem:[#allocation2 + $0x20] sm:$0xff] %vm922, %v883
      %928 = vst.msk [vmem:[#allocation2 + $0x28] sm:$0xff] %vm922, %v885
      %929 = vst.msk [vmem:[#allocation2 + $0x30] sm:$0xff] %vm922, %v887
      %930 = vst.msk [vmem:[#allocation2 + $0x38] sm:$0xff] %vm922, %v889
      %931 = vst.msk [vmem:[#allocation2 + $0x40] sm:$0xff] %vm922, %v891
      %932 = vst.msk [vmem:[#allocation2 + $0x48] sm:$0xff] %vm922, %v893
      %933 = vst.msk [vmem:[#allocation2 + $0x50] sm:$0xff] %vm922, %v895
      %934 = vst.msk [vmem:[#allocation2 + $0x58] sm:$0xff] %vm922, %v897
      %935 = vst.msk [vmem:[#allocation2 + $0x60] sm:$0xff] %vm922, %v899
      %936 = vst.msk [vmem:[#allocation2 + $0x68] sm:$0xff] %vm922, %v901
      %937 = vst.msk [vmem:[#allocation2 + $0x70] sm:$0xff] %vm922, %v903
      %938 = vst.msk [vmem:[#allocation2 + $0x78] sm:$0xff] %vm922, %v905
      %s939 = sadd.s32 %s194, 34
      %s940 = scalar_lea.vmem %s183, %s939
      %v941 = vld [vmem:[%s940] sm:$0xff]
      %v942 = vld [vmem:[%s940 + $0x8] sm:$0xff]
      %v943 = vld [vmem:[%s940 + $0x10] sm:$0xff]
      %v944 = vld [vmem:[%s940 + $0x18] sm:$0xff]
      %v945 = vld [vmem:[%s940 + $0x20] sm:$0xff]
      %v946 = vld [vmem:[%s940 + $0x28] sm:$0xff]
      %v947 = vld [vmem:[%s940 + $0x30] sm:$0xff]
      %v948 = vld [vmem:[%s940 + $0x38] sm:$0xff]
      %v949 = vld [vmem:[%s940 + $0x40] sm:$0xff]
      %v950 = vld [vmem:[%s940 + $0x48] sm:$0xff]
      %v951 = vld [vmem:[%s940 + $0x50] sm:$0xff]
      %v952 = vld [vmem:[%s940 + $0x58] sm:$0xff]
      %v953 = vld [vmem:[%s940 + $0x60] sm:$0xff]
      %v954 = vld [vmem:[%s940 + $0x68] sm:$0xff]
      %v955 = vld [vmem:[%s940 + $0x70] sm:$0xff]
      %v956 = vld [vmem:[%s940 + $0x78] sm:$0xff]
      %973 = vrot.lane.b32.xlu0 %v941, 64
      %v974 = vpop.permute.xlu0 %973
      %975 = vrot.lane.b32.xlu0 %v942, 64
      %v976 = vpop.permute.xlu0 %975
      %977 = vrot.lane.b32.xlu0 %v943, 64
      %v978 = vpop.permute.xlu0 %977
      %979 = vrot.lane.b32.xlu0 %v944, 64
      %v980 = vpop.permute.xlu0 %979
      %981 = vrot.lane.b32.xlu0 %v945, 64
      %v982 = vpop.permute.xlu0 %981
      %983 = vrot.lane.b32.xlu0 %v946, 64
      %v984 = vpop.permute.xlu0 %983
      %985 = vrot.lane.b32.xlu0 %v947, 64
      %v986 = vpop.permute.xlu0 %985
      %987 = vrot.lane.b32.xlu0 %v948, 64
      %v988 = vpop.permute.xlu0 %987
      %989 = vrot.lane.b32.xlu0 %v949, 64
      %v990 = vpop.permute.xlu0 %989
      %991 = vrot.lane.b32.xlu0 %v950, 64
      %v992 = vpop.permute.xlu0 %991
      %993 = vrot.lane.b32.xlu0 %v951, 64
      %v994 = vpop.permute.xlu0 %993
      %995 = vrot.lane.b32.xlu0 %v952, 64
      %v996 = vpop.permute.xlu0 %995
      %997 = vrot.lane.b32.xlu0 %v953, 64
      %v998 = vpop.permute.xlu0 %997
      %999 = vrot.lane.b32.xlu0 %v954, 64
      %v1000 = vpop.permute.xlu0 %999
      %1001 = vrot.lane.b32.xlu0 %v955, 64
      %v1002 = vpop.permute.xlu0 %1001
      %1003 = vrot.lane.b32.xlu0 %v956, 64
      %v1004 = vpop.permute.xlu0 %1003
      %vm1021 = vcmask 589312
      %1022 = vst.msk [vmem:[#allocation2] sm:$0xff] %vm1021, %v974
      %1023 = vst.msk [vmem:[#allocation2 + $0x8] sm:$0xff] %vm1021, %v976
      %1024 = vst.msk [vmem:[#allocation2 + $0x10] sm:$0xff] %vm1021, %v978
      %1025 = vst.msk [vmem:[#allocation2 + $0x18] sm:$0xff] %vm1021, %v980
      %1026 = vst.msk [vmem:[#allocation2 + $0x20] sm:$0xff] %vm1021, %v982
      %1027 = vst.msk [vmem:[#allocation2 + $0x28] sm:$0xff] %vm1021, %v984
      %1028 = vst.msk [vmem:[#allocation2 + $0x30] sm:$0xff] %vm1021, %v986
      %1029 = vst.msk [vmem:[#allocation2 + $0x38] sm:$0xff] %vm1021, %v988
      %1030 = vst.msk [vmem:[#allocation2 + $0x40] sm:$0xff] %vm1021, %v990
      %1031 = vst.msk [vmem:[#allocation2 + $0x48] sm:$0xff] %vm1021, %v992
      %1032 = vst.msk [vmem:[#allocation2 + $0x50] sm:$0xff] %vm1021, %v994
      %1033 = vst.msk [vmem:[#allocation2 + $0x58] sm:$0xff] %vm1021, %v996
      %1034 = vst.msk [vmem:[#allocation2 + $0x60] sm:$0xff] %vm1021, %v998
      %1035 = vst.msk [vmem:[#allocation2 + $0x68] sm:$0xff] %vm1021, %v1000
      %1036 = vst.msk [vmem:[#allocation2 + $0x70] sm:$0xff] %vm1021, %v1002
      %1037 = vst.msk [vmem:[#allocation2 + $0x78] sm:$0xff] %vm1021, %v1004
      %v1038 = vld [vmem:[#allocation2] sm:$0xff]
      %v1039 = vld [vmem:[#allocation2 + $0x8] sm:$0xff]
      %v1040 = vld [vmem:[#allocation2 + $0x10] sm:$0xff]
      %v1041 = vld [vmem:[#allocation2 + $0x18] sm:$0xff]
      %v1042 = vld [vmem:[#allocation2 + $0x20] sm:$0xff]
      %v1043 = vld [vmem:[#allocation2 + $0x28] sm:$0xff]
      %v1044 = vld [vmem:[#allocation2 + $0x30] sm:$0xff]
      %v1045 = vld [vmem:[#allocation2 + $0x38] sm:$0xff]
      %v1046 = vld [vmem:[#allocation2 + $0x40] sm:$0xff]
      %v1047 = vld [vmem:[#allocation2 + $0x48] sm:$0xff]
      %v1048 = vld [vmem:[#allocation2 + $0x50] sm:$0xff]
      %v1049 = vld [vmem:[#allocation2 + $0x58] sm:$0xff]
      %v1050 = vld [vmem:[#allocation2 + $0x60] sm:$0xff]
      %v1051 = vld [vmem:[#allocation2 + $0x68] sm:$0xff]
      %v1052 = vld [vmem:[#allocation2 + $0x70] sm:$0xff]
      %v1053 = vld [vmem:[#allocation2 + $0x78] sm:$0xff]
      %v1054 = vld [vmem:[%s1] sm:$0xff]
      %v1055 = vld [vmem:[%s1 + $0x8] sm:$0xff]
      %v1056 = vld [vmem:[%s1 + $0x10] sm:$0xff]
      %v1057 = vld [vmem:[%s1 + $0x18] sm:$0xff]
      %v1058 = vld [vmem:[%s1 + $0x20] sm:$0xff]
      %v1059 = vld [vmem:[%s1 + $0x28] sm:$0xff]
      %v1060 = vld [vmem:[%s1 + $0x30] sm:$0xff]
      %v1061 = vld [vmem:[%s1 + $0x38] sm:$0xff]
      %v1062 = vld [vmem:[%s1 + $0x40] sm:$0xff]
      %v1063 = vld [vmem:[%s1 + $0x48] sm:$0xff]
      %v1064 = vld [vmem:[%s1 + $0x50] sm:$0xff]
      %v1065 = vld [vmem:[%s1 + $0x58] sm:$0xff]
      %v1066 = vld [vmem:[%s1 + $0x60] sm:$0xff]
      %v1067 = vld [vmem:[%s1 + $0x68] sm:$0xff]
      %v1068 = vld [vmem:[%s1 + $0x70] sm:$0xff]
      %v1069 = vld [vmem:[%s1 + $0x78] sm:$0xff]
      %v1070 = vld [vmem:[%s2] sm:$0x1]
      %v1072 = vlaneseq
      %v1073 = vshrl.u32 %v1072, 7
      %v1074 = vsub.s32 0, %v1073
      %v1075 = vrot.slane %v1070, %v1074
      %1077 = vmatprep.subr.mxu0 0.0
      %1078 = vmatpush1.msra.mxu0 %v1054
      %1079 = vmatprep.subr.mxu0 0.0
      %1080 = vmatpush1.msra.mxu0 %v1055
      %1081 = vmatprep.subr.mxu0 0.0
      %1082 = vmatpush1.msra.mxu0 %v1056
      %1083 = vmatprep.subr.mxu0 0.0
      %1084 = vmatpush1.msra.mxu0 %v1057
      %1085 = vmatprep.subr.mxu0 0.0
      %1086 = vmatpush1.msra.mxu0 %v1058
      %1087 = vmatprep.subr.mxu0 0.0
      %1088 = vmatpush1.msra.mxu0 %v1059
      %1089 = vmatprep.subr.mxu0 0.0
      %1090 = vmatpush1.msra.mxu0 %v1060
      %1091 = vmatprep.subr.mxu0 0.0
      %1092 = vmatpush1.msra.mxu0 %v1061
      %1093 = vmatprep.subr.mxu0 0.0
      %1094 = vmatpush1.msra.mxu0 %v1062
      %1095 = vmatprep.subr.mxu0 0.0
      %1096 = vmatpush1.msra.mxu0 %v1063
      %1097 = vmatprep.subr.mxu0 0.0
      %1098 = vmatpush1.msra.mxu0 %v1064
      %1099 = vmatprep.subr.mxu0 0.0
      %1100 = vmatpush1.msra.mxu0 %v1065
      %1101 = vmatprep.subr.mxu0 0.0
      %1102 = vmatpush1.msra.mxu0 %v1066
      %1103 = vmatprep.subr.mxu0 0.0
      %1104 = vmatpush1.msra.mxu0 %v1067
      %1105 = vmatprep.subr.mxu0 0.0
      %1106 = vmatpush1.msra.mxu0 %v1068
      %1107 = vmatprep.subr.mxu0 0.0
      %1108 = vmatpush1.msra.mxu0 %v1069
      %1109 = vmatprep.subr.mxu0 0.0
      %1110 = vmatpush1.msra.mxu0 0.0
      %1111 = vmatprep.subr.mxu0 0.0
      %1112 = vmatpush1.msra.mxu0 0.0
      %1113 = vmatprep.subr.mxu0 0.0
      %1114 = vmatpush1.msra.mxu0 0.0
      %1115 = vmatprep.subr.mxu0 0.0
      %1116 = vmatpush1.msra.mxu0 0.0
      %1117 = vmatprep.subr.mxu0 0.0
      %1118 = vmatpush1.msra.mxu0 0.0
      %1119 = vmatprep.subr.mxu0 0.0
      %1120 = vmatpush1.msra.mxu0 0.0
      %1121 = vmatprep.subr.mxu0 0.0
      %1122 = vmatpush1.msra.mxu0 0.0
      %1123 = vmatprep.subr.mxu0 0.0
      %1124 = vmatpush1.msra.mxu0 0.0
      %1125 = vmatprep.subr.mxu0 0.0
      %1126 = vmatpush1.msra.mxu0 0.0
      %1127 = vmatprep.subr.mxu0 0.0
      %1128 = vmatpush1.msra.mxu0 0.0
      %1129 = vmatprep.subr.mxu0 0.0
      %1130 = vmatpush1.msra.mxu0 0.0
      %1131 = vmatprep.subr.mxu0 0.0
      %1132 = vmatpush1.msra.mxu0 0.0
      %1133 = vmatprep.subr.mxu0 0.0
      %1134 = vmatpush1.msra.mxu0 0.0
      %1135 = vmatprep.subr.mxu0 0.0
      %1136 = vmatpush1.msra.mxu0 0.0
      %1137 = vmatprep.subr.mxu0 0.0
      %1138 = vmatpush1.msra.mxu0 0.0
      %1139 = vmatprep.subr.mxu0 0.0
      %1140 = vmatpush1.msra.mxu0 0.0
      %1141 = vmatprep.mubr.f32.mxu0 0.0
      %1142 = vmatmul.mubr.f32.gmra.mrb[0].mxu0 %v1038
      %v1143 = vpop.f32.mrb[0].mxu0
      %v1144 = vadd.f32 %v1075, %v1143
      %v1145 = vpop.f32.mrb[0].mxu0
      %1146 = vmatprep.mubr.f32.mxu0 0.0
      %1147 = vmatmul.mubr.f32.gmra.mrb[0].mxu0 %v1039
      %v1148 = vpop.f32.mrb[0].mxu0
      %v1149 = vadd.f32 %v1075, %v1148
      %v1150 = vpop.f32.mrb[0].mxu0
      %1151 = vmatprep.mubr.f32.mxu0 0.0
      %1152 = vmatmul.mubr.f32.gmra.mrb[0].mxu0 %v1040
      %v1153 = vpop.f32.mrb[0].mxu0
      %v1154 = vadd.f32 %v1075, %v1153
      %v1155 = vpop.f32.mrb[0].mxu0
      %1156 = vmatprep.mubr.f32.mxu0 0.0
      %1157 = vmatmul.mubr.f32.gmra.mrb[0].mxu0 %v1041
      %v1158 = vpop.f32.mrb[0].mxu0
      %v1159 = vadd.f32 %v1075, %v1158
      %v1160 = vpop.f32.mrb[0].mxu0
      %1161 = vmatprep.mubr.f32.mxu0 0.0
      %1162 = vmatmul.mubr.f32.gmra.mrb[0].mxu0 %v1042
      %v1163 = vpop.f32.mrb[0].mxu0
      %v1164 = vadd.f32 %v1075, %v1163
      %v1165 = vpop.f32.mrb[0].mxu0
      %1166 = vmatprep.mubr.f32.mxu0 0.0
      %1167 = vmatmul.mubr.f32.gmra.mrb[0].mxu0 %v1043
      %v1168 = vpop.f32.mrb[0].mxu0
      %v1169 = vadd.f32 %v1075, %v1168
      %v1170 = vpop.f32.mrb[0].mxu0
      %1171 = vmatprep.mubr.f32.mxu0 0.0
      %1172 = vmatmul.mubr.f32.gmra.mrb[0].mxu0 %v1044
      %v1173 = vpop.f32.mrb[0].mxu0
      %v1174 = vadd.f32 %v1075, %v1173
      %v1175 = vpop.f32.mrb[0].mxu0
      %1176 = vmatprep.mubr.f32.mxu0 0.0
      %1177 = vmatmul.mubr.f32.gmra.mrb[0].mxu0 %v1045
      %v1178 = vpop.f32.mrb[0].mxu0
      %v1179 = vadd.f32 %v1075, %v1178
      %v1180 = vpop.f32.mrb[0].mxu0
      %1181 = vmatprep.mubr.f32.mxu0 0.0
      %1182 = vmatmul.mubr.f32.gmra.mrb[0].mxu0 %v1046
      %v1183 = vpop.f32.mrb[0].mxu0
      %v1184 = vadd.f32 %v1075, %v1183
      %v1185 = vpop.f32.mrb[0].mxu0
      %1186 = vmatprep.mubr.f32.mxu0 0.0
      %1187 = vmatmul.mubr.f32.gmra.mrb[0].mxu0 %v1047
      %v1188 = vpop.f32.mrb[0].mxu0
      %v1189 = vadd.f32 %v1075, %v1188
      %v1190 = vpop.f32.mrb[0].mxu0
      %1191 = vmatprep.mubr.f32.mxu0 0.0
      %1192 = vmatmul.mubr.f32.gmra.mrb[0].mxu0 %v1048
      %v1193 = vpop.f32.mrb[0].mxu0
      %v1194 = vadd.f32 %v1075, %v1193
      %v1195 = vpop.f32.mrb[0].mxu0
      %1196 = vmatprep.mubr.f32.mxu0 0.0
      %1197 = vmatmul.mubr.f32.gmra.mrb[0].mxu0 %v1049
      %v1198 = vpop.f32.mrb[0].mxu0
      %v1199 = vadd.f32 %v1075, %v1198
      %v1200 = vpop.f32.mrb[0].mxu0
      %1201 = vmatprep.mubr.f32.mxu0 0.0
      %1202 = vmatmul.mubr.f32.gmra.mrb[0].mxu0 %v1050
      %v1203 = vpop.f32.mrb[0].mxu0
      %v1204 = vadd.f32 %v1075, %v1203
      %v1205 = vpop.f32.mrb[0].mxu0
      %1206 = vmatprep.mubr.f32.mxu0 0.0
      %1207 = vmatmul.mubr.f32.gmra.mrb[0].mxu0 %v1051
      %v1208 = vpop.f32.mrb[0].mxu0
      %v1209 = vadd.f32 %v1075, %v1208
      %v1210 = vpop.f32.mrb[0].mxu0
      %1211 = vmatprep.mubr.f32.mxu0 0.0
      %1212 = vmatmul.mubr.f32.gmra.mrb[0].mxu0 %v1052
      %v1213 = vpop.f32.mrb[0].mxu0
      %v1214 = vadd.f32 %v1075, %v1213
      %v1215 = vpop.f32.mrb[0].mxu0
      %1216 = vmatprep.mubr.f32.mxu0 0.0
      %1217 = vmatmul.mubr.f32.gmra.mrb[0].mxu0 %v1053
      %v1218 = vpop.f32.mrb[0].mxu0
      %v1219 = vadd.f32 %v1075, %v1218
      %v1220 = vpop.f32.mrb[0].mxu0
      %1221 = vdwg.mxu0
      %1222 = vst [vmem:[%s192] sm:$0xff] %v1144
      %1223 = vst [vmem:[%s192 + $0x8] sm:$0xff] %v1149
      %1224 = vst [vmem:[%s192 + $0x10] sm:$0xff] %v1154
      %1225 = vst [vmem:[%s192 + $0x18] sm:$0xff] %v1159
      %1226 = vst [vmem:[%s192 + $0x20] sm:$0xff] %v1164
      %1227 = vst [vmem:[%s192 + $0x28] sm:$0xff] %v1169
      %1228 = vst [vmem:[%s192 + $0x30] sm:$0xff] %v1174
      %1229 = vst [vmem:[%s192 + $0x38] sm:$0xff] %v1179
      %1230 = vst [vmem:[%s192 + $0x40] sm:$0xff] %v1184
      %1231 = vst [vmem:[%s192 + $0x48] sm:$0xff] %v1189
      %1232 = vst [vmem:[%s192 + $0x50] sm:$0xff] %v1194
      %1233 = vst [vmem:[%s192 + $0x58] sm:$0xff] %v1199
      %1234 = vst [vmem:[%s192 + $0x60] sm:$0xff] %v1204
      %1235 = vst [vmem:[%s192 + $0x68] sm:$0xff] %v1209
      %1236 = vst [vmem:[%s192 + $0x70] sm:$0xff] %v1214
      %1237 = vst [vmem:[%s192 + $0x78] sm:$0xff] %v1219
      %s1238 = smul.u32 16, %s19
      %p1239 = scmp.lt.s32.totalorder %s18, 1
      %s1240 = scalar_select %p1239, %s18, 1
      %p1241 = scmp.lt.s32.totalorder %s1238, 31
      %s1242 = scalar_select %p1241, %s1238, 31
      %s1243 = smul.addr %s1240, 32
      %s1244 = sadd.s32 %s1242, %s1243
      %s1245 = smul.addr %s1244, 8
      %s1246 = scalar_lea.vmem %s3, %s1245
      // Predicated region
      $region33: #{concat_conv2d.1} parent=31 // pred_check
        %p1247 = pneg %p114
      $region34: #{concat_conv2d.1} parent=31 // pred_check_branch
        %1249 = sbr.rel (%p1247) target = $region36
      $region35: #{concat_conv2d.1} parent=31 // pred_region
        %s1250 = smul.u32 16, %s19
      $region36: #{concat_conv2d.1} parent=31 // pred_fallthru
        _
    $region32: #{concat_conv2d.1} parent=5 // pred_fallthru
      _
    %p1251 = scmp.le.s32.totalorder 2, %s9
    // Predicated region
    $region37: #{concat_conv2d.1} parent=5 // pred_check
      %p1252 = pneg %p1251
    $region38: #{concat_conv2d.1} parent=5 // pred_check_branch
      %1254 = sbr.rel (%p1252) target = $region40
    $region39: #{concat_conv2d.1} parent=5 // pred_region
      %s1255 = ssub.s32 %s9, 2
      // Predicated region
      $region41: #{concat_conv2d.1} parent=39 // pred_check
        %p1256 = pneg %p120
      $region42: #{concat_conv2d.1} parent=39 // pred_check_branch
        %1258 = sbr.rel (%p1256) target = $region44
      $region43: #{concat_conv2d.1} parent=39 // pred_region
        %s1259 = smul.u32 16, %s21
        %p1260 = scmp.lt.s32.totalorder %s20, 1
        %s1261 = scalar_select %p1260, %s20, 1
        %p1262 = scmp.lt.s32.totalorder %s1259, 31
        %s1263 = scalar_select %p1262, %s1259, 31
        %s1264 = smul.addr %s1261, 32
        %s1265 = sadd.s32 %s1263, %s1264
        %s1266 = smul.addr %s1265, 8
        %s1267 = scalar_lea.vmem %s3, %s1266
      $region44: #{concat_conv2d.1} parent=39 // pred_fallthru
        _
    $region40: #{concat_conv2d.1} parent=5 // pred_fallthru
      _
  $region6: #{concat_conv2d.1} parent=0 // loop_footer
    %s13 = sadd.s32 1, %s9
  $region7: #{concat_conv2d.1} parent=0 // loop_footer_branch
    %8 = sbr.rel target = $region3
  $region8: #{concat_conv2d.1} parent=0 // loop_exit
    _

</llo_original>
